<compile_context>
chip_gen: v5e
topology: v5e:2x2
jax: 0.10.0
libtpu: 0.0.40
codegen_flags: <defaults>
</compile_context>

<pallas_src>
import functools

import jax
import jax.numpy as jnp
from jax.experimental import pallas as pl
from jax.experimental.pallas import tpu as pltpu

FOCAL_ALPHA = 0.25   # cfg.MODEL.DiffusionDet.ALPHA
FOCAL_GAMMA = 2.0    # cfg.MODEL.DiffusionDet.GAMMA

LANE = 128
_N_SLAB_ROWS = 24    # 22 data rows padded to a multiple of 8 sublanes


def _round_up(x, m):
    return ((x + m - 1) // m) * m


# --------------------------------------------------------------------------
# Kernel 1: tiled sigmoid focal loss  (loss_labels, use_focal=True)
#   grid over row tiles of the [R_pad, C_pad] logit slab; the (1, C_pad)
#   output is resident across the grid and accumulates per-lane partial sums.
# --------------------------------------------------------------------------
def _focal_kernel(logits_ref, tcls_ref, out_ref, *, num_classes, alpha, gamma):
    @pl.when(pl.program_id(0) == 0)
    def _():
        out_ref[...] = jnp.zeros_like(out_ref)

    x = logits_ref[...].astype(jnp.float32)                  # [TR, Cp]
    t = tcls_ref[...]                                        # [TR, 1] i32; -1 => padded row
    cls_iota = jax.lax.broadcasted_iota(jnp.int32, x.shape, 1)
    onehot = (cls_iota == t).astype(jnp.float32)             # background/padded rows -> all zero
    valid = ((cls_iota < num_classes) & (t >= 0)).astype(jnp.float32)

    # One exp per element, reused for BCE-with-logits and for sigmoid.
    e = jnp.exp(-jnp.abs(x))
    ce = jnp.maximum(x, 0.0) - x * onehot + jnp.log1p(e)     # BCE-with-logits
    r = pl.reciprocal(1.0 + e, approx=True)
    p = jnp.where(x >= 0.0, r, e * r)                        # sigmoid(x)
    p_t = p * onehot + (1.0 - p) * (1.0 - onehot)
    one_m_pt = 1.0 - p_t
    if gamma == 2.0:
        mod = one_m_pt * one_m_pt
    else:
        mod = jnp.power(one_m_pt, gamma)
    loss = ce * mod
    if alpha >= 0:
        loss = (alpha * onehot + (1.0 - alpha) * (1.0 - onehot)) * loss
    loss = loss * valid

    out_ref[...] += jnp.sum(loss, axis=0, keepdims=True)     # [1, Cp] per-lane partials


def focal_loss_sum(logits, target_classes, num_classes):
    """logits [R, C] (any float dtype), target_classes [R] int32 (num_classes=bg)."""
    R, C = logits.shape
    Cp = _round_up(C, LANE)
    TR = 512 if R > 512 else max(16, _round_up(R, 16))
    Rp = _round_up(R, TR)

    logits_p = jnp.pad(logits, ((0, Rp - R), (0, Cp - C)))
    tcls_p = jnp.pad(target_classes.reshape(R, 1).astype(jnp.int32),
                     ((0, Rp - R), (0, 0)), constant_values=-1)

    kernel = functools.partial(_focal_kernel, num_classes=num_classes,
                               alpha=FOCAL_ALPHA, gamma=FOCAL_GAMMA)
    out = pl.pallas_call(
        kernel,
        grid=(Rp // TR,),
        in_specs=[pl.BlockSpec((TR, Cp), lambda i: (i, 0)),
                  pl.BlockSpec((TR, 1), lambda i: (i, 0))],
        out_specs=pl.BlockSpec((1, Cp), lambda i: (0, 0)),
        out_shape=jax.ShapeDtypeStruct((1, Cp), jnp.float32),
        compiler_params=pltpu.CompilerParams(
            dimension_semantics=("arbitrary",)),   # reduction into resident output
    )(logits_p, tcls_p)
    return jnp.sum(out)


# --------------------------------------------------------------------------
# Kernel 2: fused L1 + GIoU + smooth-L1 height losses
#   Single launch, single packed input slab [24, K_pad] with K on the lane
#   axis.  Row layout:
#     0-3   pred boxes, normalized xyxy
#     4-7   gt boxes,   normalized cxcywh
#     8-11  pred boxes, absolute xyxy
#     12-15 gt boxes,   absolute xyxy
#     16-17 pred height (dh, dz)
#     18-19 gt height   (h, z)
#     20    gt label (as f32)
#     21    validity mask
#     22-23 zero padding
#   Output: (1, 128) f32, lane 0 = l1 sum, lane 1 = giou sum, lane 2 = height sum.
# --------------------------------------------------------------------------
def _box_height_kernel(slab_ref, out_ref, *, wh, wz):
    s = slab_ref[...]                                        # [24, Kp] f32, lane-dense
    m = s[21:22, :]
    valid = m > 0.0

    # --- L1 on normalized boxes (target cxcywh -> xyxy) ---
    cx, cy, w, h = s[4:5], s[5:6], s[6:7], s[7:8]
    tx0, ty0 = cx - 0.5 * w, cy - 0.5 * h
    tx1, ty1 = cx + 0.5 * w, cy + 0.5 * h
    l1 = (jnp.abs(s[0:1] - tx0) + jnp.abs(s[1:2] - ty0)
          + jnp.abs(s[2:3] - tx1) + jnp.abs(s[3:4] - ty1)) * m
    l1_sum = jnp.sum(l1)

    # --- GIoU on absolute xyxy boxes ---
    ax0, ay0, ax1, ay1 = s[8:9], s[9:10], s[10:11], s[11:12]
    bx0, by0, bx1, by1 = s[12:13], s[13:14], s[14:15], s[15:16]
    area_a = (ax1 - ax0) * (ay1 - ay0)
    area_b = (bx1 - bx0) * (by1 - by0)
    iw = jnp.maximum(jnp.minimum(ax1, bx1) - jnp.maximum(ax0, bx0), 0.0)
    ih = jnp.maximum(jnp.minimum(ay1, by1) - jnp.maximum(ay0, by0), 0.0)
    inter = iw * ih
    union = area_a + area_b - inter
    cw = jnp.maximum(ax1, bx1) - jnp.minimum(ax0, bx0)
    ch = jnp.maximum(ay1, by1) - jnp.minimum(ay0, by0)
    area_c = jnp.maximum(cw, 0.0) * jnp.maximum(ch, 0.0)
    # Guard masked/degenerate entries BEFORE dividing so 0/0 never poisons the sum.
    union_safe = jnp.where(valid, union, 1.0)
    area_c_safe = jnp.where(valid, area_c, 1.0)
    iou = inter / union_safe
    giou = iou - (area_c_safe - union_safe) / area_c_safe
    giou_sum = jnp.sum((1.0 - giou) * m)

    # --- smooth-L1 height loss ---
    lab = s[20:21, :]
    hc = jnp.where(lab == 0.0, 130.05,
         jnp.where(lab == 1.0, 149.6,
         jnp.where(lab == 2.0, 147.9, 1.0)))
    pred_dh = s[16:17] * wh
    pred_dz = s[17:18] * wz
    th_h = jnp.where(valid, s[18:19], hc)                    # masked rows: log(1) = 0
    tgt_dh = jnp.log(th_h / hc)
    tgt_dz = (s[19:20] - 0.5 * hc) / hc

    def smooth_l1(d):                                        # beta = 1.0 (torch default)
        ad = jnp.abs(d)
        return jnp.where(ad < 1.0, 0.5 * d * d, ad - 0.5)

    h_sum = jnp.sum((smooth_l1(pred_dh - tgt_dh) + smooth_l1(pred_dz - tgt_dz)) * m)

    lane = jax.lax.broadcasted_iota(jnp.int32, out_ref.shape, 1)
    out_ref[...] = (jnp.where(lane == 0, l1_sum, 0.0)
                    + jnp.where(lane == 1, giou_sum, 0.0)
                    + jnp.where(lane == 2, h_sum, 0.0))


def box_height_loss_sums(slab, wh, wz):
    R, Kp = slab.shape
    kernel = functools.partial(_box_height_kernel, wh=wh, wz=wz)
    out = pl.pallas_call(
        kernel,
        grid=(1,),
        in_specs=[pl.BlockSpec((R, Kp), lambda i: (0, 0))],
        out_specs=pl.BlockSpec((1, LANE), lambda i: (0, 0)),
        out_shape=jax.ShapeDtypeStruct((1, LANE), jnp.float32),
        compiler_params=pltpu.CompilerParams(dimension_semantics=("arbitrary",)),
    )(slab)
    return out[0, 0], out[0, 1], out[0, 2]


# --------------------------------------------------------------------------
# Criterion wrapper (ragged gather/scatter glue in plain JAX)
# --------------------------------------------------------------------------
class SetCriterionDynamicKPallas:
    """use_focal=True, use_fed_loss=False, losses=['labels','boxes','height']."""

    def __init__(self, num_classes, weight_dict, losses=("labels", "boxes", "height")):
        self.num_classes = num_classes
        self.weight_dict = weight_dict
        self.losses = losses

    def _match(self, pred_boxes, tgt_boxes_xyxy):
        # TODO(synk): the real HungarianMatcherDynamicK is an external module
        # (dynamic top-k optimal transport assignment); stand-in: each gt box
        # is matched to the query whose predicted box has minimum L1 distance.
        # Per-coordinate accumulation avoids the [B, N, M, 4] intermediate.
        cost = jnp.abs(pred_boxes[:, :, None, 0] - tgt_boxes_xyxy[:, None, :, 0])
        for c in range(1, 4):
            cost = cost + jnp.abs(pred_boxes[:, :, None, c] - tgt_boxes_xyxy[:, None, :, c])
        return jnp.argmin(cost, axis=1)                      # [B, M] matched query per gt

    def __call__(self, outputs, targets):
        pred_logits = outputs["pred_logits"]                 # [B, N, C]
        pred_boxes = outputs["pred_boxes"]                   # [B, N, 4] abs xyxy
        pred_height = outputs["pred_height"]                 # [B, N, 2]
        B, N, C = pred_logits.shape
        M = targets["labels"].shape[1]
        K = B * M

        matched_q = self._match(pred_boxes, targets["boxes_xyxy"])   # [B, M]
        b_ix = jnp.arange(B)[:, None]                                # [B, 1]

        # world_size == 1; TODO(synk): torch.distributed.all_reduce of num_boxes omitted.
        # With the dense stand-in matcher every gt is matched -> mask is all-ones.
        num_boxes = float(max(K, 1))
        num_matched = float(max(K, 1))

        losses = {}

        if "labels" in self.losses:
            target_classes = jnp.full((B, N), self.num_classes, jnp.int32)
            target_classes = target_classes.at[b_ix, matched_q].set(
                targets["labels"].astype(jnp.int32))
            cls_sum = focal_loss_sum(pred_logits.reshape(B * N, C),
                                     target_classes.reshape(B * N),
                                     self.num_classes)
            losses["loss_ce"] = cls_sum / num_matched
            # TODO(synk): use_fed_loss branch (torch.unique + torch.multinomial) not implemented.

        need_boxes = "boxes" in self.losses
        need_height = "height" in self.losses
        if need_boxes or need_height:
            wh, wz = 1.0, 1.0
            if need_height:
                wh, _wg, wz = self.weight_dict["height_loss"]        # wg unused (as in reference)

            src_boxes_m = pred_boxes[b_ix, matched_q]                # [B, M, 4]
            src_boxes_norm = src_boxes_m / targets["image_size_xyxy"][:, None, :]
            src_h_m = pred_height[b_ix, matched_q]                   # [B, M, 2]

            # Pack everything into one transposed, lane-dense slab [24, K_pad].
            rows = jnp.concatenate([
                src_boxes_norm.reshape(K, 4).T,                      # 0-3
                targets["boxes"].reshape(K, 4).T,                    # 4-7
                src_boxes_m.reshape(K, 4).T,                         # 8-11
                targets["boxes_xyxy"].reshape(K, 4).T,               # 12-15
                src_h_m.reshape(K, 2).T,                             # 16-17
                targets["height"].reshape(K, 2).T,                   # 18-19
                targets["labels"].reshape(1, K).astype(jnp.float32), # 20
                jnp.ones((1, K), jnp.float32),                       # 21 mask
            ], axis=0).astype(jnp.float32)
            Kp = _round_up(K, LANE)
            slab = jnp.pad(rows, ((0, _N_SLAB_ROWS - rows.shape[0]), (0, Kp - K)))

            l1_sum, giou_sum, h_sum = box_height_loss_sums(slab, float(wh), float(wz))
            if need_boxes:
                losses["loss_bbox"] = l1_sum / num_matched
                losses["loss_giou"] = giou_sum / num_matched
            if need_height:
                losses["loss_height"] = h_sum / num_boxes

        # TODO(synk): aux_outputs loop omitted (would fold aux heads into the same
        # grids as extra row tiles / extra K columns instead of re-launching).
        return losses


# --------------------------------------------------------------------------
# Driver
# --------------------------------------------------------------------------
if __name__ == "__main__":
    key = jax.random.PRNGKey(0)
    B, N, C, M = 2, 8, 3, 4
    W, H = 640.0, 480.0

    k = jax.random.split(key, 8)
    pred_logits = jax.random.normal(k[0], (B, N, C), jnp.float32)

    # predicted boxes: positive cxcywh -> absolute xyxy (valid boxes for GIoU)
    p_cxcy = 0.2 + 0.6 * jax.random.uniform(k[1], (B, N, 2))
    p_wh = 0.05 + 0.25 * jax.random.uniform(k[2], (B, N, 2))
    p_xy0 = (p_cxcy - 0.5 * p_wh) * jnp.array([W, H])
    p_xy1 = (p_cxcy + 0.5 * p_wh) * jnp.array([W, H])
    pred_boxes = jnp.concatenate([p_xy0, p_xy1], axis=-1).astype(jnp.float32)

    pred_height = 0.1 * jax.random.normal(k[3], (B, N, 2), jnp.float32)

    # ground-truth targets (dense, M per image)
    labels = jax.random.randint(k[4], (B, M), 0, C).astype(jnp.int32)
    t_cxcy = 0.25 + 0.5 * jax.random.uniform(k[5], (B, M, 2))
    t_wh = 0.05 + 0.25 * jax.random.uniform(k[6], (B, M, 2))
    tgt_boxes_cxcywh = jnp.concatenate([t_cxcy, t_wh], axis=-1).astype(jnp.float32)
    t_xy0 = (t_cxcy - 0.5 * t_wh) * jnp.array([W, H])
    t_xy1 = (t_cxcy + 0.5 * t_wh) * jnp.array([W, H])
    tgt_boxes_xyxy = jnp.concatenate([t_xy0, t_xy1], axis=-1).astype(jnp.float32)
    hz = jax.random.uniform(k[7], (B, M, 2))
    tgt_height = jnp.stack([100.0 + 80.0 * hz[..., 0], 50.0 + 50.0 * hz[..., 1]],
                           axis=-1).astype(jnp.float32)
    image_size_xyxy = jnp.tile(jnp.array([[W, H, W, H]], jnp.float32), (B, 1))

    outputs = {"pred_logits": pred_logits, "pred_boxes": pred_boxes,
               "pred_height": pred_height}
    targets = {"labels": labels, "boxes": tgt_boxes_cxcywh, "boxes_xyxy": tgt_boxes_xyxy,
               "height": tgt_height, "image_size_xyxy": image_size_xyxy}

    weight_dict = {"loss_ce": 2.0, "loss_bbox": 5.0, "loss_giou": 2.0,
                   "height_loss": (1.0, 1.0, 1.0)}

    criterion = SetCriterionDynamicKPallas(num_classes=C, weight_dict=weight_dict,
                                           losses=("labels", "boxes", "height"))
    losses = criterion(outputs, targets)
    losses = {name: jax.block_until_ready(v) for name, v in losses.items()}

    assert set(losses) == {"loss_ce", "loss_bbox", "loss_giou", "loss_height"}
    assert all(bool(jnp.isfinite(v)) for v in losses.values()), losses
    print("KERNEL_OK")
</pallas_src>

<mosaic_0001>
module attributes {stable_mosaic.version = 11 : i64} {
  func.func @_focal_kernel(%arg0: i32, %arg1: memref<16x128xf32, #tpu.memory_space<vmem>>, %arg2: memref<16x1xi32, #tpu.memory_space<vmem>>, %arg3: memref<1x128xf32, #tpu.memory_space<vmem>>) attributes {dimension_semantics = [#tpu.dimension_semantics<arbitrary>], iteration_bounds = array<i64: 1>, scalar_prefetch = 0 : i64, scratch_operands = 0 : i64, tpu.core_type = #tpu.core_type<tc>, window_params = [{transform_indices = @transform_0, window_bounds = array<i64: 16, 128>}, {transform_indices = @transform_1, window_bounds = array<i64: 16, 1>}, {pipeline_mode = #tpu.pipeline_mode<synchronous>, transform_indices = @transform_2, window_bounds = array<i64: 1, 128>}]} {
    %c0_i32 = arith.constant 0 : i32
    %0 = arith.cmpi eq, %arg0, %c0_i32 : i32
    %1 = arith.extui %0 : i1 to i32
    %c0_i32_0 = arith.constant 0 : i32
    %2 = arith.cmpi ne, %1, %c0_i32_0 : i32
    scf.if %2 {
      %cst_19 = arith.constant 0.000000e+00 : f32
      %60 = vector.broadcast %cst_19 : f32 to vector<1x128xf32>
      %c0_20 = arith.constant 0 : index
      %c0_21 = arith.constant 0 : index
      %61 = vector.load %arg3[%c0_20, %c0_21] : memref<1x128xf32, #tpu.memory_space<vmem>>, vector<1x128xf32>
      tpu.vector_store %arg3[%c0_20, %c0_21], %60 {strides = array<i32>} : memref<1x128xf32, #tpu.memory_space<vmem>>, vector<1x128xf32>,
    } else {
    }
    %c0 = arith.constant 0 : index
    %c0_1 = arith.constant 0 : index
    %3 = vector.load %arg1[%c0, %c0_1] : memref<16x128xf32, #tpu.memory_space<vmem>>, vector<16x128xf32>
    %c0_2 = arith.constant 0 : index
    %c0_3 = arith.constant 0 : index
    %4 = vector.load %arg2[%c0_2, %c0_3] : memref<16x1xi32, #tpu.memory_space<vmem>>, vector<16x1xi32>
    %5 = tpu.iota {dimensions = array<i32: 1>} : vector<16x128xi32>
    %6 = vector.broadcast %4 : vector<16x1xi32> to vector<16x128xi32>
    %7 = arith.cmpi eq, %5, %6 : vector<16x128xi32>
    %8 = arith.extui %7 : vector<16x128xi1> to vector<16x128xi32>
    %9 = arith.sitofp %8 : vector<16x128xi32> to vector<16x128xf32>
    %c3_i32 = arith.constant 3 : i32
    %10 = vector.broadcast %c3_i32 : i32 to vector<16x128xi32>
    %11 = arith.cmpi slt, %5, %10 : vector<16x128xi32>
    %c0_i32_4 = arith.constant 0 : i32
    %12 = vector.broadcast %c0_i32_4 : i32 to vector<16x1xi32>
    %13 = arith.cmpi sge, %4, %12 : vector<16x1xi32>
    %14 = vector.broadcast %13 : vector<16x1xi1> to vector<16x128xi1>
    %15 = arith.andi %11, %14 : vector<16x128xi1>
    %16 = arith.extui %15 : vector<16x128xi1> to vector<16x128xi32>
    %17 = arith.sitofp %16 : vector<16x128xi32> to vector<16x128xf32>
    %18 = math.absf %3 : vector<16x128xf32>
    %cst = arith.constant 0.000000e+00 : f32
    %19 = vector.broadcast %cst : f32 to vector<16x128xf32>
    %20 = arith.subf %19, %18 : vector<16x128xf32>
    %21 = math.exp %20 : vector<16x128xf32>
    %cst_5 = arith.constant 0.000000e+00 : f32
    %22 = vector.broadcast %cst_5 : f32 to vector<16x128xf32>
    %23 = arith.maximumf %3, %22 : vector<16x128xf32>
    %24 = arith.mulf %3, %9 : vector<16x128xf32>
    %25 = arith.subf %23, %24 : vector<16x128xf32>
    %26 = math.log1p %21 : vector<16x128xf32>
    %27 = arith.addf %25, %26 : vector<16x128xf32>
    %cst_6 = arith.constant 1.000000e+00 : f32
    %28 = vector.broadcast %cst_6 : f32 to vector<16x128xf32>
    %29 = arith.addf %28, %21 : vector<16x128xf32>
    %30 = tpu.reciprocal %29 {approx = true} : vector<16x128xf32> -> vector<16x128xf32>
    %cst_7 = arith.constant 0.000000e+00 : f32
    %31 = vector.broadcast %cst_7 : f32 to vector<16x128xf32>
    %32 = arith.cmpf oge, %3, %31 : vector<16x128xf32>
    %33 = arith.mulf %21, %30 : vector<16x128xf32>
    %34 = arith.select %32, %30, %33 : vector<16x128xi1>, vector<16x128xf32>
    %35 = arith.mulf %34, %9 : vector<16x128xf32>
    %cst_8 = arith.constant 1.000000e+00 : f32
    %36 = vector.broadcast %cst_8 : f32 to vector<16x128xf32>
    %37 = arith.subf %36, %34 : vector<16x128xf32>
    %cst_9 = arith.constant 1.000000e+00 : f32
    %38 = vector.broadcast %cst_9 : f32 to vector<16x128xf32>
    %39 = arith.subf %38, %9 : vector<16x128xf32>
    %40 = arith.mulf %37, %39 : vector<16x128xf32>
    %41 = arith.addf %35, %40 : vector<16x128xf32>
    %cst_10 = arith.constant 1.000000e+00 : f32
    %42 = vector.broadcast %cst_10 : f32 to vector<16x128xf32>
    %43 = arith.subf %42, %41 : vector<16x128xf32>
    %44 = arith.mulf %43, %43 : vector<16x128xf32>
    %45 = arith.mulf %27, %44 : vector<16x128xf32>
    %cst_11 = arith.constant 2.500000e-01 : f32
    %46 = vector.broadcast %cst_11 : f32 to vector<16x128xf32>
    %47 = arith.mulf %46, %9 : vector<16x128xf32>
    %cst_12 = arith.constant 1.000000e+00 : f32
    %48 = vector.broadcast %cst_12 : f32 to vector<16x128xf32>
    %49 = arith.subf %48, %9 : vector<16x128xf32>
    %cst_13 = arith.constant 7.500000e-01 : f32
    %50 = vector.broadcast %cst_13 : f32 to vector<16x128xf32>
    %51 = arith.mulf %50, %49 : vector<16x128xf32>
    %52 = arith.addf %47, %51 : vector<16x128xf32>
    %53 = arith.mulf %52, %45 : vector<16x128xf32>
    %54 = arith.mulf %53, %17 : vector<16x128xf32>
    %c0_14 = arith.constant 0 : index
    %c0_15 = arith.constant 0 : index
    %55 = vector.load %arg3[%c0_14, %c0_15] : memref<1x128xf32, #tpu.memory_space<vmem>>, vector<1x128xf32>
    %cst_16 = arith.constant dense<0.000000e+00> : vector<128xf32>
    %56 = vector.multi_reduction <add>, %54, %cst_16 [0] : vector<16x128xf32> to vector<128xf32>
    %57 = vector.shape_cast %56 : vector<128xf32> to vector<1x128xf32>
    %58 = arith.addf %55, %57 : vector<1x128xf32>
    %c0_17 = arith.constant 0 : index
    %c0_18 = arith.constant 0 : index
    %59 = vector.load %arg3[%c0_17, %c0_18] : memref<1x128xf32, #tpu.memory_space<vmem>>, vector<1x128xf32>
    tpu.vector_store %arg3[%c0_17, %c0_18], %58 {strides = array<i32>} : memref<1x128xf32, #tpu.memory_space<vmem>>, vector<1x128xf32>,
    return
  }
  func.func @transform_0(%arg0: i32) -> (i32, i32) {
    %c0_i32 = arith.constant 0 : i32
    %c0_i32_0 = arith.constant 0 : i32
    return %arg0, %c0_i32 : i32, i32
  }
  func.func @transform_1(%arg0: i32) -> (i32, i32) {
    %c0_i32 = arith.constant 0 : i32
    %c0_i32_0 = arith.constant 0 : i32
    return %arg0, %c0_i32 : i32, i32
  }
  func.func @transform_2(%arg0: i32) -> (i32, i32) {
    %c0_i32 = arith.constant 0 : i32
    %c0_i32_0 = arith.constant 0 : i32
    %c0_i32_1 = arith.constant 0 : i32
    return %c0_i32, %c0_i32_0 : i32, i32
  }
}

</mosaic_0001>

<llo_original>
// kernel: tpu_custom_call.1
$region0: #{tpu_custom_call.1}
  #allocation0 [shape = 'u32[]', space=smem, size = 0x4, offset = 0x4, fixed_abs, tag = 'smem constant byte address 0x4 - core index']
  #allocation1 [shape = 'u32[72,128]{1,0:T(1,128)}', space=vmem, size = 0x9000, scoped, tag = 'internal scratch']
  %s0 = inlined_call_operand.vmem [shape: f32[16,128], index: 0, kind: input, shape index: {}]
  %s1 = inlined_call_operand.vmem [shape: s32[16,1], index: 1, kind: input, shape index: {}]
  %s2 = inlined_call_operand.hbm [shape: f32[1,128], index: 2, kind: output, shape index: {}]
  %s3 = sld [smem:[#allocation0]]
  $region22: #{tpu_custom_call.1} parent=0
    _
  %s5 = ssub.s32 1, %s3
  %s6 = scalar_select 0, %s5, %s3
  $region1: #{tpu_custom_call.1} parent=0
    #allocation2 [shape = 'u8[512]{0}', space=vmem, size = 0x400, scoped, tag = 'output window, operand 0, single buffered']
    #allocation3 [shape = 's32[1]{0}', space=sflag, size = 0x4, scoped, tag = 'scoped memory for tpu_custom_call.1']
    %7 = vsyncpa [#allocation3], 0
    // Predicated region
    $region2: #{tpu_custom_call.1} parent=1 // pred_check
      _
    $region3: #{tpu_custom_call.1} parent=1 // pred_check_branch
      %9 = sbr.rel (0) target = $region5
    $region4: #{tpu_custom_call.1} parent=1 // pred_region
      _
    $region5: #{tpu_custom_call.1} parent=1 // pred_fallthru
      _
    // Predicated region
    $region6: #{tpu_custom_call.1} parent=1 // pred_check
      _
    $region7: #{tpu_custom_call.1} parent=1 // pred_check_branch
      %11 = sbr.rel (0) target = $region9
    $region8: #{tpu_custom_call.1} parent=1 // pred_region
      _
    $region9: #{tpu_custom_call.1} parent=1 // pred_fallthru
      _
    %p12 = scmp.eq.s32.totalorder 0, 0
    // Predicated region
    $region10: #{tpu_custom_call.1} parent=1 // pred_check
      %p13 = pneg %p12
    $region11: #{tpu_custom_call.1} parent=1 // pred_check_branch
      %15 = sbr.rel (%p13) target = $region13
    $region12: #{tpu_custom_call.1} parent=1 // pred_region
      %16 = vst [vmem:[#allocation2] sm:$0x1] 0.0
    $region13: #{tpu_custom_call.1} parent=1 // pred_fallthru
      _
    %v17 = vld [vmem:[%s0] sm:$0xff]
    %v18 = vld [vmem:[%s0 + $0x8] sm:$0xff]
    %v19 = vld [vmem:[%s1] sm:$0xff]
    %v20 = vld [vmem:[%s1 + $0x8] sm:$0xff]
    %v21 = vlaneseq
    %v22 = vand.u32 %v21, 127
    %23 = vset.pattern.permute.xlu0 0
    %24 = vperm.xlu0 %23, %v19
    %v25 = vpop.permute.xlu0 %24
    %26 = vset.pattern.permute.xlu0 0
    %27 = vperm.xlu0 %26, %v20
    %v28 = vpop.permute.xlu0 %27
    %vm29 = vcmp.eq.s32.totalorder %v22, %v25
    %vm30 = vcmp.eq.s32.totalorder %v22, %v28
    %v31 = vsel %vm29, 1, 0
    %v32 = vsel %vm30, 1, 0
    %v33 = vcvt.s32.f32 %v31
    %v34 = vcvt.s32.f32 %v32
    %vm35 = vcmp.lt.s32.totalorder %v22, 3
    %vm36 = vcmp.ge.s32.totalorder %v19, 0
    %vm37 = vcmp.ge.s32.totalorder %v20, 0
    %v38 = vsel %vm36, 1, 0
    %v39 = vsel %vm37, 1, 0
    %40 = vset.pattern.permute.xlu0 0
    %41 = vperm.xlu0 %40, %v38
    %v42 = vpop.permute.xlu0 %41
    %43 = vset.pattern.permute.xlu0 0
    %44 = vperm.xlu0 %43, %v39
    %v45 = vpop.permute.xlu0 %44
    %vm46 = vcmp.eq.s32.totalorder %v42, 1
    %vm47 = vcmp.eq.s32.totalorder %v45, 1
    %vm48 = vmand %vm35, %vm46
    %vm49 = vmand %vm35, %vm47
    %v50 = vsel %vm48, 1, 0
    %v51 = vsel %vm49, 1, 0
    %v52 = vcvt.s32.f32 %v50
    %v53 = vcvt.s32.f32 %v51
    %v54 = vand.u32 2147483647, %v17
    %v55 = vand.u32 2147483647, %v18
    %v56 = vsub.f32 0.0, %v54
    %v57 = vsub.f32 0.0, %v55
    %v58 = vmul.f32 %v56, 1.442695
    %v59 = vpow.pop %v58
    %v60 = vmul.f32 %v57, 1.442695
    %v61 = vpow.pop %v60
    %v62 = vmax.f32 %v17, 0.0
    %v63 = vmax.f32 %v18, 0.0
    %v64 = vmul.f32 %v17, %v33
    %v65 = vmul.f32 %v18, %v34
    %v66 = vsub.f32 %v62, %v64
    %v67 = vsub.f32 %v63, %v65
    %v68 = vadd.f32 %v59, 1.0
    %v69 = vlog2.pop %v68
    %v70 = vmul.f32 %v69, 0.6931472
    %v71 = vmul.f32 -0.5, %v59
    %v72 = vadd.f32 %v71, 1.0
    %v73 = vmul.f32 %v72, %v59
    %v74 = vand.u32 2147483647, %v59
    %vm75 = vcmp.lt.f32.partialorder %v74, 0.0004427343
    %v76 = vsel %vm75, %v73, %v70
    %v77 = vadd.f32 %v61, 1.0
    %v78 = vlog2.pop %v77
    %v79 = vmul.f32 %v78, 0.6931472
    %v80 = vmul.f32 -0.5, %v61
    %v81 = vadd.f32 %v80, 1.0
    %v82 = vmul.f32 %v81, %v61
    %v83 = vand.u32 2147483647, %v61
    %vm84 = vcmp.lt.f32.partialorder %v83, 0.0004427343
    %v85 = vsel %vm84, %v82, %v79
    %v86 = vadd.f32 %v66, %v76
    %v87 = vadd.f32 %v67, %v85
    %v88 = vadd.f32 %v59, 1.0
    %v89 = vadd.f32 %v61, 1.0
    %v90 = vrcp.pop %v88
    %v91 = vrcp.pop %v89
    %vm92 = vcmp.ge.f32.partialorder %v17, 0.0
    %vm93 = vcmp.ge.f32.partialorder %v18, 0.0
    %v94 = vmul.f32 %v59, %v90
    %v95 = vmul.f32 %v61, %v91
    %v96 = vsel %vm92, %v90, %v94
    %v97 = vsel %vm93, %v91, %v95
    %v98 = vmul.f32 %v96, %v33
    %v99 = vmul.f32 %v97, %v34
    %v100 = vsub.f32 1.0, %v96
    %v101 = vsub.f32 1.0, %v97
    %v102 = vsub.f32 1.0, %v33
    %v103 = vsub.f32 1.0, %v34
    %v104 = vmul.f32 %v100, %v102
    %v105 = vmul.f32 %v101, %v103
    %v106 = vadd.f32 %v98, %v104
    %v107 = vadd.f32 %v99, %v105
    %v108 = vsub.f32 1.0, %v106
    %v109 = vsub.f32 1.0, %v107
    %v110 = vmul.f32 %v108, %v108
    %v111 = vmul.f32 %v109, %v109
    %v112 = vmul.f32 %v86, %v110
    %v113 = vmul.f32 %v87, %v111
    %v114 = vmul.f32 %v33, 0.25
    %v115 = vmul.f32 %v34, 0.25
    %v116 = vmul.f32 %v102, 0.75
    %v117 = vmul.f32 %v103, 0.75
    %v118 = vadd.f32 %v114, %v116
    %v119 = vadd.f32 %v115, %v117
    %v120 = vmul.f32 %v118, %v112
    %v121 = vmul.f32 %v119, %v113
    %v122 = vmul.f32 %v120, %v52
    %v123 = vmul.f32 %v121, %v53
    %v124 = vld [vmem:[#allocation2] sm:$0x1]
    %v125 = vadd.f32 %v122, %v123
    %v126 = vrot.slane %v125, 4
    %v127 = vadd.f32 %v125, %v126
    %v128 = vrot.slane %v127, 2
    %v129 = vadd.f32 %v127, %v128
    %v130 = vrot.slane %v129, 1
    %v131 = vadd.f32 %v129, %v130
    %v132 = vadd.f32 %v124, %v131
    %133 = vst [vmem:[#allocation2] sm:$0x1] %v132
    // Predicated region
    $region14: #{tpu_custom_call.1} parent=1 // pred_check
      _
    $region15: #{tpu_custom_call.1} parent=1 // pred_check_branch
      %135 = sbr.rel (0) target = $region17
    $region16: #{tpu_custom_call.1} parent=1 // pred_region
      %137 = vsyncadd [#allocation3], 0
      %s139 = sshll.u32 [#allocation2], 4
      %s140 = int_to_ptr.vmem [resolvable:$true] %s139
      %s141 = sshll.u32 %s2, 4
      %s142 = int_to_ptr.hbm [resolvable:$true] %s141
      %144 = dma.vmem_to_hbm [thread:$0]  %s140, 16, %s142, [#allocation3]
    $region17: #{tpu_custom_call.1} parent=1 // pred_fallthru
      _
    // Predicated region
    $region18: #{tpu_custom_call.1} parent=1 // pred_check
      _
    $region19: #{tpu_custom_call.1} parent=1 // pred_check_branch
      %146 = sbr.rel (0) target = $region21
    $region20: #{tpu_custom_call.1} parent=1 // pred_region
      %148 = dma.done [#allocation3], 16
    $region21: #{tpu_custom_call.1} parent=1 // pred_fallthru
      _
    %149 = vsyncpa [#allocation3], 1

</llo_original>
